<compile_context>
chip_gen: v5e
topology: v5e:2x2
jax: 0.10.0
libtpu: 0.0.40
codegen_flags: <defaults>
</compile_context>

<pallas_src>
import jax
import jax.numpy as jnp
from jax import lax
from jax.experimental import pallas as pl
from jax.experimental.pallas import tpu as pltpu

LN_EPS = 1e-12


def _round_up(x, m):
    return ((x + m - 1) // m) * m


def _gelu_exact(x):
    # exact (erf-based) GELU, matching transformers' ACT2FN["gelu"] / torch default
    return 0.5 * x * (1.0 + lax.erf(x / jnp.sqrt(2.0).astype(x.dtype)))


def _vmem_capacity_bytes():
    """Per-TensorCore VMEM capacity; conservative 64 MiB (v7x) if query fails."""
    try:
        info = pltpu.get_tpu_info()
        cap = getattr(info, "vmem_capacity_bytes", None)
        if cap:
            return int(cap)
    except Exception:
        pass
    return 64 << 20


def _resident_spec(block_shape, index_map):
    """Grid-invariant parameter: single pipeline buffer (no double-buffering)."""
    try:
        return pl.BlockSpec(block_shape, index_map, pipeline_mode=pl.Buffered(1))
    except (TypeError, AttributeError):
        # older JAX without pipeline_mode: fall back to default buffering
        return pl.BlockSpec(block_shape, index_map)


# ---------------------------------------------------------------------------
# Kernel 1: fused MLM head, tiled over (row tiles, vocab tiles)
#   h = LayerNorm(gelu(x @ W1 + b1))        -- computed once per row tile (j == 0)
#   scores_tile = h @ Wdec_tile + b_dec_tile -- per vocab tile, bf16 MXU / f32 acc
# ---------------------------------------------------------------------------
def lm_head_kernel(x_ref, w1_ref, b1_ref, g_ref, beta_ref, wdec_ref, bdec_ref,
                   o_ref, h_ref):
    @pl.when(pl.program_id(1) == 0)
    def _():
        # dense (hidden -> hidden): bf16 x bf16 on the MXU, f32 accumulation
        h = jnp.dot(x_ref[...], w1_ref[...], preferred_element_type=jnp.float32)
        h = h + b1_ref[...]                                   # (1, H) broadcasts
        # GELU (EUP) + LayerNorm in f32
        h = _gelu_exact(h)
        mean = jnp.mean(h, axis=-1, keepdims=True)
        centered = h - mean
        var = jnp.mean(centered * centered, axis=-1, keepdims=True)
        h = centered * lax.rsqrt(var + LN_EPS)
        h = h * g_ref[...] + beta_ref[...]
        # cache post-LN activations in bf16 for the decoder GEMM
        h_ref[...] = h.astype(h_ref.dtype)

    # decoder (hidden -> vocab tile): bf16 x bf16 -> f32 accumulation
    scores = jnp.dot(h_ref[...], wdec_ref[...],
                     preferred_element_type=jnp.float32)
    o_ref[...] = (scores + bdec_ref[...]).astype(o_ref.dtype)


# ---------------------------------------------------------------------------
# Kernel 2: NSP head (sublane- and lane-padded; wrapper slices back to (B, 2))
#   logits = pooled @ W_sr_padded + b_sr_padded
# ---------------------------------------------------------------------------
def nsp_kernel(p_ref, w_ref, b_ref, o_ref):
    logits = jnp.dot(p_ref[...], w_ref[...], preferred_element_type=jnp.float32)
    o_ref[...] = (logits + b_ref[...]).astype(o_ref.dtype)


def bert_pretraining_heads(sequence_output, pooled_output, params,
                           *, tm=None, tn=2048, scores_dtype=jnp.bfloat16):
    """sequence_output: (B,S,H), pooled_output: (B,H)
       -> (prediction_scores (B,S,V), seq_relationship_score (B,2)).

    tm / tn are tile-size caps (rows x vocab-cols of the LM-head output tile).
    tm defaults generation-aware (2048 on 128-MiB-VMEM chips, 1024 on 64-MiB chips)
    and auto-shrinks until the double-buffered pipeline fits the scoped-VMEM budget.
    scores_dtype controls the logits output dtype (bf16 default; pass jnp.float32
    for tighter parity with the PyTorch f32 reference).
    """
    B, S, H = sequence_output.shape
    V = params["decoder_w"].shape[1]
    M = B * S

    # --- generation-aware budgets ----------------------------------------------
    vmem_cap = _vmem_capacity_bytes()
    big_vmem = vmem_cap >= (96 << 20)                 # v5e/v6e: 128 MiB, v7x: 64 MiB
    vmem_ceiling = (100 << 20) if big_vmem else (52 << 20)
    if tm is None:
        # Wdec re-stream traffic scales as 1/tm -> use the largest row tile that fits.
        tm = 2048 if big_vmem else 1024

    out_bytes = jnp.dtype(scores_dtype).itemsize

    # --- tile sizes & padding so every block is full and lane-dense ------------
    tn = min(tn, _round_up(V, 128))        # lane-dense vocab tile (multiple of 128)
    tm = min(tm, _round_up(M, 8))          # sublane-aligned row tile

    def footprint(tm_, tn_):
        return (2 * tm_ * H * 2            # x tile (bf16), double-buffered
                + H * H * 2                # W1 (bf16), single-buffered
                + 3 * H * 4                # b1 / gamma / beta (f32), single-buffered
                + 2 * H * tn_ * 2          # Wdec tile (bf16), double-buffered
                + 2 * tn_ * 4              # decoder bias tile, double-buffered
                + 2 * tm_ * tn_ * out_bytes  # output tile, double-buffered
                + tm_ * H * 2)             # bf16 h scratch

    # shrink the row tile until the pipeline fits under the scoped-VMEM ceiling
    # (leave ~8 MiB headroom for Mosaic internal scratch).
    while tm > 256 and footprint(tm, tn) > vmem_ceiling - (8 << 20):
        tm //= 2
    tm = max(8, (tm // 8) * 8)

    Mp = _round_up(M, tm)
    Vp = _round_up(V, tn)
    # NOTE(v7x): for best megacore utilisation keep Mp//tm even when it is > 1.

    # --- operands (bf16 streams for the big tensors, f32 for small params) -----
    x = sequence_output.reshape(M, H).astype(jnp.bfloat16)
    if Mp != M:
        x = jnp.pad(x, ((0, Mp - M), (0, 0)))

    w1 = params["dense_w"].astype(jnp.bfloat16)                 # (H, H)
    b1 = params["dense_b"].reshape(1, H).astype(jnp.float32)
    g = params["ln_gamma"].reshape(1, H).astype(jnp.float32)
    beta = params["ln_beta"].reshape(1, H).astype(jnp.float32)

    wdec = params["decoder_w"].astype(jnp.bfloat16)             # (H, V)
    bdec = params["decoder_b"].astype(jnp.float32)              # (V,)
    if Vp != V:
        wdec = jnp.pad(wdec, ((0, 0), (0, Vp - V)))
        bdec = jnp.pad(bdec, (0, Vp - V))
    bdec = bdec.reshape(1, Vp)

    grid = (Mp // tm, Vp // tn)
    vmem_limit = int(min(max(footprint(tm, tn) + (8 << 20), 32 << 20), vmem_ceiling))

    scores = pl.pallas_call(
        lm_head_kernel,
        out_shape=jax.ShapeDtypeStruct((Mp, Vp), scores_dtype),
        grid_spec=pltpu.PrefetchScalarGridSpec(
            num_scalar_prefetch=0,
            grid=grid,
            in_specs=[
                pl.BlockSpec((tm, H), lambda i, j: (i, 0)),      # x row tile
                _resident_spec((H, H), lambda i, j: (0, 0)),     # dense W (resident)
                _resident_spec((1, H), lambda i, j: (0, 0)),     # dense b
                _resident_spec((1, H), lambda i, j: (0, 0)),     # LN gamma
                _resident_spec((1, H), lambda i, j: (0, 0)),     # LN beta
                pl.BlockSpec((H, tn), lambda i, j: (0, j)),      # decoder W vocab tile
                pl.BlockSpec((1, tn), lambda i, j: (0, j)),      # decoder bias tile
            ],
            out_specs=pl.BlockSpec((tm, tn), lambda i, j: (i, j)),
            scratch_shapes=[pltpu.VMEM((tm, H), jnp.bfloat16)],  # cached h
        ),
        compiler_params=pltpu.CompilerParams(
            dimension_semantics=("parallel", "arbitrary"),
            vmem_limit_bytes=vmem_limit,
        ),
    )(x, w1, b1, g, beta, wdec, bdec)

    prediction_scores = scores[:M, :V].reshape(B, S, V)

    # --- NSP head: pad batch to multiple of 8 rows, outputs to 128 lanes --------
    n_rel = params["seq_rel_w"].shape[1]                        # = 2
    NSP_LANES = 128
    Bp = _round_up(B, 8)
    pooled = pooled_output.astype(jnp.float32)
    if Bp != B:
        pooled = jnp.pad(pooled, ((0, Bp - B), (0, 0)))
    w_sr = jnp.pad(params["seq_rel_w"].astype(jnp.float32),
                   ((0, 0), (0, NSP_LANES - n_rel)))            # (H, 128)
    b_sr = jnp.pad(params["seq_rel_b"].astype(jnp.float32),
                   (0, NSP_LANES - n_rel)).reshape(1, NSP_LANES)

    nsp_padded = pl.pallas_call(
        nsp_kernel,
        out_shape=jax.ShapeDtypeStruct((Bp, NSP_LANES), jnp.float32),
        in_specs=[
            pl.BlockSpec((Bp, H), lambda: (0, 0)),
            pl.BlockSpec((H, NSP_LANES), lambda: (0, 0)),
            pl.BlockSpec((1, NSP_LANES), lambda: (0, 0)),
        ],
        out_specs=pl.BlockSpec((Bp, NSP_LANES), lambda: (0, 0)),
    )(pooled, w_sr, b_sr)
    seq_relationship_score = nsp_padded[:B, :n_rel]

    return prediction_scores, seq_relationship_score


def _reference(sequence_output, pooled_output, params):
    # pure-JAX f32 reference matching the PyTorch module
    h = sequence_output @ params["dense_w"] + params["dense_b"]
    h = _gelu_exact(h)
    mean = jnp.mean(h, axis=-1, keepdims=True)
    var = jnp.mean((h - mean) ** 2, axis=-1, keepdims=True)
    h = (h - mean) / jnp.sqrt(var + LN_EPS)
    h = h * params["ln_gamma"] + params["ln_beta"]
    scores = h @ params["decoder_w"] + params["decoder_b"]
    nsp = pooled_output @ params["seq_rel_w"] + params["seq_rel_b"]
    return scores, nsp


if __name__ == "__main__":
    # small config; V=300 and M=26 deliberately exercise the V/M padding paths,
    # and the explicit tm=16 / tn=128 run gives a (2, 3) grid so the cached-h
    # reuse across vocab tiles is exercised.
    B, S, H, V = 2, 13, 128, 300

    key = jax.random.PRNGKey(0)
    ks = jax.random.split(key, 8)

    params = {
        "dense_w": 0.02 * jax.random.normal(ks[0], (H, H), jnp.float32),
        "dense_b": 0.02 * jax.random.normal(ks[1], (H,), jnp.float32),
        "ln_gamma": jnp.ones((H,), jnp.float32),
        "ln_beta": jnp.zeros((H,), jnp.float32),
        "decoder_w": 0.02 * jax.random.normal(ks[2], (H, V), jnp.float32),
        "decoder_b": 0.02 * jax.random.normal(ks[3], (V,), jnp.float32),
        "seq_rel_w": 0.02 * jax.random.normal(ks[4], (H, 2), jnp.float32),
        "seq_rel_b": 0.02 * jax.random.normal(ks[7], (2,), jnp.float32),
    }

    sequence_output = jax.random.normal(ks[5], (B, S, H), jnp.float32)
    pooled_output = jax.random.normal(ks[6], (B, H), jnp.float32)

    ref_scores, ref_nsp = _reference(sequence_output, pooled_output, params)

    # run 1: small explicit tiles -> multi-tile grid (exercises h-cache reuse)
    scores, nsp = bert_pretraining_heads(sequence_output, pooled_output, params,
                                         tm=16, tn=128)
    jax.block_until_ready((scores, nsp))
    assert scores.shape == (B, S, V) and nsp.shape == (B, 2)
    # bf16 streams / bf16 logits (f32 accumulation) -> allow small drift
    assert jnp.allclose(scores.astype(jnp.float32), ref_scores, atol=3e-2, rtol=3e-2), \
        float(jnp.max(jnp.abs(scores.astype(jnp.float32) - ref_scores)))
    assert jnp.allclose(nsp, ref_nsp, atol=1e-4, rtol=1e-4)

    # run 2: generation-aware defaults (tiles clamp down to the tiny problem size)
    scores_d, nsp_d = bert_pretraining_heads(sequence_output, pooled_output, params)
    jax.block_until_ready((scores_d, nsp_d))
    assert scores_d.shape == (B, S, V) and nsp_d.shape == (B, 2)
    assert jnp.allclose(scores_d.astype(jnp.float32), ref_scores, atol=3e-2, rtol=3e-2)
    assert jnp.allclose(nsp_d, ref_nsp, atol=1e-4, rtol=1e-4)

    print("KERNEL_OK")
</pallas_src>

<mosaic_0001>
module attributes {stable_mosaic.version = 11 : i64} {
  func.func @lm_head_kernel(%arg0: i32, %arg1: i32, %arg2: memref<16x128xbf16, #tpu.memory_space<vmem>>, %arg3: memref<128x128xbf16, #tpu.memory_space<vmem>>, %arg4: memref<1x128xf32, #tpu.memory_space<vmem>>, %arg5: memref<1x128xf32, #tpu.memory_space<vmem>>, %arg6: memref<1x128xf32, #tpu.memory_space<vmem>>, %arg7: memref<128x128xbf16, #tpu.memory_space<vmem>>, %arg8: memref<1x128xf32, #tpu.memory_space<vmem>>, %arg9: memref<16x128xbf16, #tpu.memory_space<vmem>>, %arg10: memref<16x128xbf16, #tpu.memory_space<vmem>>) attributes {dimension_semantics = [#tpu.dimension_semantics<parallel>, #tpu.dimension_semantics<arbitrary>], iteration_bounds = array<i64: 2, 3>, scalar_prefetch = 0 : i64, scratch_operands = 1 : i64, tpu.core_type = #tpu.core_type<tc>, window_params = [{transform_indices = @transform_0, window_bounds = array<i64: 16, 128>}, {pipeline_mode = #tpu.pipeline_mode<synchronous>, transform_indices = @transform_1, window_bounds = array<i64: 128, 128>}, {pipeline_mode = #tpu.pipeline_mode<synchronous>, transform_indices = @transform_2, window_bounds = array<i64: 1, 128>}, {pipeline_mode = #tpu.pipeline_mode<synchronous>, transform_indices = @transform_3, window_bounds = array<i64: 1, 128>}, {pipeline_mode = #tpu.pipeline_mode<synchronous>, transform_indices = @transform_4, window_bounds = array<i64: 1, 128>}, {transform_indices = @transform_5, window_bounds = array<i64: 128, 128>}, {transform_indices = @transform_6, window_bounds = array<i64: 1, 128>}, {transform_indices = @transform_7, window_bounds = array<i64: 16, 128>}]} {
    %c0_i32 = arith.constant 0 : i32
    %0 = arith.cmpi eq, %arg1, %c0_i32 : i32
    %1 = arith.extui %0 : i1 to i32
    %c0_i32_0 = arith.constant 0 : i32
    %2 = arith.cmpi ne, %1, %c0_i32_0 : i32
    scf.if %2 {
      %c0_8 = arith.constant 0 : index
      %c0_9 = arith.constant 0 : index
      %11 = vector.load %arg2[%c0_8, %c0_9] : memref<16x128xbf16, #tpu.memory_space<vmem>>, vector<16x128xbf16>
      %c0_10 = arith.constant 0 : index
      %c0_11 = arith.constant 0 : index
      %12 = vector.load %arg3[%c0_10, %c0_11] : memref<128x128xbf16, #tpu.memory_space<vmem>>, vector<128x128xbf16>
      %cst_12 = arith.constant dense<0.000000e+00> : vector<16x128xf32>
      %13 = tpu.matmul %11, %12, %cst_12 {dimension_numbers = #tpu.dot_dimension_numbers<[1], [0], [0], [1], [0, 0, 1, 1], [], []>} : vector<16x128xbf16>, vector<128x128xbf16>, vector<16x128xf32> -> vector<16x128xf32>
      %c0_13 = arith.constant 0 : index
      %c0_14 = arith.constant 0 : index
      %14 = vector.load %arg4[%c0_13, %c0_14] : memref<1x128xf32, #tpu.memory_space<vmem>>, vector<1x128xf32>
      %15 = vector.broadcast %14 : vector<1x128xf32> to vector<16x128xf32>
      %16 = arith.addf %13, %15 : vector<16x128xf32>
      %cst_15 = arith.constant 5.000000e-01 : f32
      %17 = vector.broadcast %cst_15 : f32 to vector<16x128xf32>
      %18 = arith.mulf %17, %16 : vector<16x128xf32>
      %cst_16 = arith.constant 2.000000e+00 : f32
      %19 = math.sqrt %cst_16 : f32
      %20 = vector.broadcast %19 : f32 to vector<16x128xf32>
      %21 = arith.divf %16, %20 : vector<16x128xf32>
      %22 = math.erf %21 : vector<16x128xf32>
      %cst_17 = arith.constant 1.000000e+00 : f32
      %23 = vector.broadcast %cst_17 : f32 to vector<16x128xf32>
      %24 = arith.addf %23, %22 : vector<16x128xf32>
      %25 = arith.mulf %18, %24 : vector<16x128xf32>
      %cst_18 = arith.constant dense<0.000000e+00> : vector<16xf32>
      %26 = vector.multi_reduction <add>, %25, %cst_18 [1] : vector<16x128xf32> to vector<16xf32>
      %27 = vector.shape_cast %26 : vector<16xf32> to vector<16x1xf32>
      %cst_19 = arith.constant 1.280000e+02 : f32
      %28 = vector.broadcast %cst_19 : f32 to vector<16x1xf32>
      %29 = arith.divf %27, %28 : vector<16x1xf32>
      %30 = vector.broadcast %29 : vector<16x1xf32> to vector<16x128xf32>
      %31 = arith.subf %25, %30 : vector<16x128xf32>
      %32 = arith.mulf %31, %31 : vector<16x128xf32>
      %cst_20 = arith.constant dense<0.000000e+00> : vector<16xf32>
      %33 = vector.multi_reduction <add>, %32, %cst_20 [1] : vector<16x128xf32> to vector<16xf32>
      %34 = vector.shape_cast %33 : vector<16xf32> to vector<16x1xf32>
      %cst_21 = arith.constant 1.280000e+02 : f32
      %35 = vector.broadcast %cst_21 : f32 to vector<16x1xf32>
      %36 = arith.divf %34, %35 : vector<16x1xf32>
      %cst_22 = arith.constant 9.99999996E-13 : f32
      %37 = vector.broadcast %cst_22 : f32 to vector<16x1xf32>
      %38 = arith.addf %36, %37 : vector<16x1xf32>
      %39 = math.rsqrt %38 : vector<16x1xf32>
      %40 = vector.broadcast %39 : vector<16x1xf32> to vector<16x128xf32>
      %41 = arith.mulf %31, %40 : vector<16x128xf32>
      %c0_23 = arith.constant 0 : index
      %c0_24 = arith.constant 0 : index
      %42 = vector.load %arg5[%c0_23, %c0_24] : memref<1x128xf32, #tpu.memory_space<vmem>>, vector<1x128xf32>
      %43 = vector.broadcast %42 : vector<1x128xf32> to vector<16x128xf32>
      %44 = arith.mulf %41, %43 : vector<16x128xf32>
      %c0_25 = arith.constant 0 : index
      %c0_26 = arith.constant 0 : index
      %45 = vector.load %arg6[%c0_25, %c0_26] : memref<1x128xf32, #tpu.memory_space<vmem>>, vector<1x128xf32>
      %46 = vector.broadcast %45 : vector<1x128xf32> to vector<16x128xf32>
      %47 = arith.addf %44, %46 : vector<16x128xf32>
      %48 = arith.truncf %47 : vector<16x128xf32> to vector<16x128xbf16>
      %c0_27 = arith.constant 0 : index
      %c0_28 = arith.constant 0 : index
      %49 = vector.load %arg10[%c0_27, %c0_28] : memref<16x128xbf16, #tpu.memory_space<vmem>>, vector<16x128xbf16>
      tpu.vector_store %arg10[%c0_27, %c0_28], %48 {strides = array<i32>} : memref<16x128xbf16, #tpu.memory_space<vmem>>, vector<16x128xbf16>,
    } else {
    }
    %c0 = arith.constant 0 : index
    %c0_1 = arith.constant 0 : index
    %3 = vector.load %arg10[%c0, %c0_1] : memref<16x128xbf16, #tpu.memory_space<vmem>>, vector<16x128xbf16>
    %c0_2 = arith.constant 0 : index
    %c0_3 = arith.constant 0 : index
    %4 = vector.load %arg7[%c0_2, %c0_3] : memref<128x128xbf16, #tpu.memory_space<vmem>>, vector<128x128xbf16>
    %cst = arith.constant dense<0.000000e+00> : vector<16x128xf32>
    %5 = tpu.matmul %3, %4, %cst {dimension_numbers = #tpu.dot_dimension_numbers<[1], [0], [0], [1], [0, 0, 1, 1], [], []>} : vector<16x128xbf16>, vector<128x128xbf16>, vector<16x128xf32> -> vector<16x128xf32>
    %c0_4 = arith.constant 0 : index
    %c0_5 = arith.constant 0 : index
    %6 = vector.load %arg8[%c0_4, %c0_5] : memref<1x128xf32, #tpu.memory_space<vmem>>, vector<1x128xf32>
    %7 = vector.broadcast %6 : vector<1x128xf32> to vector<16x128xf32>
    %8 = arith.addf %5, %7 : vector<16x128xf32>
    %9 = arith.truncf %8 : vector<16x128xf32> to vector<16x128xbf16>
    %c0_6 = arith.constant 0 : index
    %c0_7 = arith.constant 0 : index
    %10 = vector.load %arg9[%c0_6, %c0_7] : memref<16x128xbf16, #tpu.memory_space<vmem>>, vector<16x128xbf16>
    tpu.vector_store %arg9[%c0_6, %c0_7], %9 {strides = array<i32>} : memref<16x128xbf16, #tpu.memory_space<vmem>>, vector<16x128xbf16>,
    return
  }
  func.func @transform_0(%arg0: i32, %arg1: i32) -> (i32, i32) {
    %c0_i32 = arith.constant 0 : i32
    %c0_i32_0 = arith.constant 0 : i32
    return %arg0, %c0_i32 : i32, i32
  }
  func.func @transform_1(%arg0: i32, %arg1: i32) -> (i32, i32) {
    %c0_i32 = arith.constant 0 : i32
    %c0_i32_0 = arith.constant 0 : i32
    %c0_i32_1 = arith.constant 0 : i32
    return %c0_i32, %c0_i32_0 : i32, i32
  }
  func.func @transform_2(%arg0: i32, %arg1: i32) -> (i32, i32) {
    %c0_i32 = arith.constant 0 : i32
    %c0_i32_0 = arith.constant 0 : i32
    %c0_i32_1 = arith.constant 0 : i32
    return %c0_i32, %c0_i32_0 : i32, i32
  }
  func.func @transform_3(%arg0: i32, %arg1: i32) -> (i32, i32) {
    %c0_i32 = arith.constant 0 : i32
    %c0_i32_0 = arith.constant 0 : i32
    %c0_i32_1 = arith.constant 0 : i32
    return %c0_i32, %c0_i32_0 : i32, i32
  }
  func.func @transform_4(%arg0: i32, %arg1: i32) -> (i32, i32) {
    %c0_i32 = arith.constant 0 : i32
    %c0_i32_0 = arith.constant 0 : i32
    %c0_i32_1 = arith.constant 0 : i32
    return %c0_i32, %c0_i32_0 : i32, i32
  }
  func.func @transform_5(%arg0: i32, %arg1: i32) -> (i32, i32) {
    %c0_i32 = arith.constant 0 : i32
    %c0_i32_0 = arith.constant 0 : i32
    return %c0_i32, %arg1 : i32, i32
  }
  func.func @transform_6(%arg0: i32, %arg1: i32) -> (i32, i32) {
    %c0_i32 = arith.constant 0 : i32
    %c0_i32_0 = arith.constant 0 : i32
    return %c0_i32, %arg1 : i32, i32
  }
  func.func @transform_7(%arg0: i32, %arg1: i32) -> (i32, i32) {
    %c0_i32 = arith.constant 0 : i32
    return %arg0, %arg1 : i32, i32
  }
}

</mosaic_0001>

<llo_original>
// kernel: tpu_custom_call.1
$region0: #{tpu_custom_call.1}
  #allocation0 [shape = 'u32[]', space=smem, size = 0x4, offset = 0x4, fixed_abs, tag = 'smem constant byte address 0x4 - core index']
  #allocation1 [shape = 'u32[72,128]{1,0:T(1,128)}', space=vmem, size = 0x9000, scoped, tag = 'internal scratch']
  #allocation2 [shape = 'bf16[16,128]{1,0:T(8,128)(2,1)}', space=vmem, size = 0x1000, scoped, tag = 'scratch operand']
  %s0 = inlined_call_operand.hbm [shape: bf16[32,128], index: 0, kind: input, shape index: {}]
  %s1 = inlined_call_operand.hbm [shape: bf16[128,128], index: 1, kind: input, shape index: {}]
  %s2 = inlined_call_operand.vmem [shape: f32[1,128], index: 2, kind: input, shape index: {}]
  %s3 = inlined_call_operand.vmem [shape: f32[1,128], index: 3, kind: input, shape index: {}]
  %s4 = inlined_call_operand.hbm [shape: f32[1,128], index: 4, kind: input, shape index: {}]
  %s5 = inlined_call_operand.hbm [shape: bf16[128,384], index: 5, kind: input, shape index: {}]
  %s6 = inlined_call_operand.vmem [shape: f32[1,384], index: 6, kind: input, shape index: {}]
  %s7 = inlined_call_operand.hbm [shape: bf16[32,384], index: 7, kind: output, shape index: {}]
  %s8 = sld [smem:[#allocation0]]
  $region81: #{tpu_custom_call.1} parent=0
    _
  %s10 = ssub.s32 1, %s8
  %s11 = scalar_select 0, %s10, %s8
  $region1: #{tpu_custom_call.1} parent=0
    #allocation3 [shape = 'u8[8192]{0}', space=vmem, size = 0x2000, scoped, tag = 'input window, operand 0']
    #allocation4 [shape = 's32[2]{0}', space=sflag, size = 0x8, scoped, tag = 'scoped memory for tpu_custom_call.1']
    #allocation5 [shape = 's32[2]{0}', space=sflag, size = 0x8, scoped, tag = 'scoped memory for tpu_custom_call.1']
    #allocation6 [shape = 'u8[32768]{0}', space=vmem, size = 0x8000, scoped, tag = 'input window, operand 1, single buffered']
    #allocation7 [shape = 's32[1]{0}', space=sflag, size = 0x4, scoped, tag = 'scoped memory for tpu_custom_call.1']
    #allocation8 [shape = 'u8[512]{0}', space=vmem, size = 0x400, scoped, tag = 'input window, operand 4, single buffered']
    #allocation9 [shape = 'u8[65536]{0}', space=vmem, size = 0x10000, scoped, tag = 'input window, operand 5']
    #allocation10 [shape = 's32[2]{0}', space=sflag, size = 0x8, scoped, tag = 'scoped memory for tpu_custom_call.1']
    #allocation11 [shape = 'u8[8192]{0}', space=vmem, size = 0x2000, scoped, tag = 'output window, operand 0']
    %12 = vsyncpa [#allocation4], 0
    %s13 = scalar_lea.sflag [#allocation4], 1
    %14 = vsyncpa %s13, 0
    %15 = vsyncpa [#allocation7], 0
    %16 = vsyncpa [#allocation10], 0
    %s17 = scalar_lea.sflag [#allocation10], 1
    %18 = vsyncpa %s17, 0
    %19 = vsyncpa [#allocation5], 0
    %s20 = scalar_lea.sflag [#allocation5], 1
    %21 = vsyncpa %s20, 0
    loop: start=0, step=1, limit=8
    $region2: #{tpu_custom_call.1} parent=1 // loop_pre_header
      _
    $region3: #{tpu_custom_call.1} parent=1 // loop_header
      %s23 = sphi 0, %s27
      %p24 = scmp.ge.s32.totalorder %s23, 8
      %s30 = sphi 0, %s42
      %s31 = sphi 0, %s38
      %s32 = sphi 0, %s30
      %s33 = sphi 0, %s31
      %s34 = sphi 0, %s32
      %s35 = sphi 0, %s33
      %s45 = sphi 0, %s47
      %s48 = sphi 0, %s45
      %s49 = sphi 0, %s48
      %s65 = sphi 0, %s49
      %s69 = sphi 0, %s69
      %s71 = sphi 0, %s69
      %s72 = sphi 0, %s71
      %s86 = sphi 0, %s72
      %s90 = sphi 0, %s90
      %s92 = sphi 0, %s90
      %s93 = sphi 0, %s92
      %s107 = sphi 0, %s93
      %s111 = sphi 0, %s111
      %s113 = sphi 0, %s111
      %s114 = sphi 0, %s113
      %s128 = sphi 0, %s114
      %s132 = sphi 0, %s132
      %s134 = sphi 0, %s132
      %s135 = sphi 0, %s134
      %s149 = sphi 0, %s135
      %s155 = sphi 0, %s157
      %s158 = sphi 0, %s155
      %s159 = sphi 0, %s158
      %s175 = sphi 0, %s159
      %s181 = sphi 0, %s183
      %s184 = sphi 0, %s181
      %s185 = sphi 0, %s184
      %s201 = sphi 0, %s185
      %s209 = sphi 0, %s211
      %s212 = sphi 0, %s209
      %s213 = sphi 0, %s212
      %s229 = sphi 0, %s213
    $region4: #{tpu_custom_call.1} parent=1 // loop_header_branch
      %26 = sbr.rel (%p24) target = $region8
    $region5: #{tpu_custom_call.1} parent=1 // loop_body
      %s28 = ssub.s32 %s23, 1
      %s29 = ssub.s32 %s23, 2
      %s36 = sadd.s32 1, %s31
      %p37 = scmp.ge.s32.totalorder %s36, 3
      %s38 = scalar_select %p37, 0, %s36
      %s39 = sadd.s32 1, %s30
      %s40 = scalar_select %p37, %s39, %s30
      %p41 = scmp.ge.s32.totalorder %s40, 2
      %s42 = scalar_select %p41, 0, %s40
      %s43 = ssub.s32 %s30, %s42
      %p44 = scmp.eq.s32.totalorder %s43, 0
      %s46 = sadd.s32 %s45, 1
      %s47 = scalar_select %p44, %s45, %s46
      %p50 = pneg %p44
      %p51 = scmp.eq.s32.totalorder %s23, 5
      %p52 = por %p50, %p51
      %p53 = scmp.ne.s32.totalorder %s45, %s48
      %p54 = scmp.eq.s32.totalorder %s23, 0
      %p55 = por %p53, %p54
      %p56 = scmp.ne.s32.totalorder %s45, %s48
      %p57 = scmp.eq.s32.totalorder %s28, 5
      %p58 = por %p56, %p57
      %p59 = scmp.ne.s32.totalorder %s48, %s49
      %p60 = scmp.eq.s32.totalorder %s28, 0
      %p61 = por %p59, %p60
      %p62 = scmp.ne.s32.totalorder %s48, %s49
      %p63 = scmp.eq.s32.totalorder %s29, 5
      %p64 = por %p62, %p63
      %p66 = scmp.ne.s32.totalorder %s49, %s65
      %p67 = scmp.eq.s32.totalorder %s29, 0
      %p68 = por %p66, %p67
      %s70 = sadd.s32 %s69, 1
      %p73 = scmp.eq.s32.totalorder %s23, 5
      %p74 = scmp.ne.s32.totalorder %s69, %s71
      %p75 = scmp.eq.s32.totalorder %s23, 0
      %p76 = por %p74, %p75
      %p77 = scmp.ne.s32.totalorder %s69, %s71
      %p78 = scmp.eq.s32.totalorder %s28, 5
      %p79 = por %p77, %p78
      %p80 = scmp.ne.s32.totalorder %s71, %s72
      %p81 = scmp.eq.s32.totalorder %s28, 0
      %p82 = por %p80, %p81
      %p83 = scmp.ne.s32.totalorder %s71, %s72
      %p84 = scmp.eq.s32.totalorder %s29, 5
      %p85 = por %p83, %p84
      %p87 = scmp.ne.s32.totalorder %s72, %s86
      %p88 = scmp.eq.s32.totalorder %s29, 0
      %p89 = por %p87, %p88
      %s91 = sadd.s32 %s90, 1
      %p94 = scmp.eq.s32.totalorder %s23, 5
      %p95 = scmp.ne.s32.totalorder %s90, %s92
      %p96 = scmp.eq.s32.totalorder %s23, 0
      %p97 = por %p95, %p96
      %p98 = scmp.ne.s32.totalorder %s90, %s92
      %p99 = scmp.eq.s32.totalorder %s28, 5
      %p100 = por %p98, %p99
      %p101 = scmp.ne.s32.totalorder %s92, %s93
      %p102 = scmp.eq.s32.totalorder %s28, 0
      %p103 = por %p101, %p102
      %p104 = scmp.ne.s32.totalorder %s92, %s93
      %p105 = scmp.eq.s32.totalorder %s29, 5
      %p106 = por %p104, %p105
      %p108 = scmp.ne.s32.totalorder %s93, %s107
      %p109 = scmp.eq.s32.totalorder %s29, 0
      %p110 = por %p108, %p109
      %s112 = sadd.s32 %s111, 1
      %p115 = scmp.eq.s32.totalorder %s23, 5
      %p116 = scmp.ne.s32.totalorder %s111, %s113
      %p117 = scmp.eq.s32.totalorder %s23, 0
      %p118 = por %p116, %p117
      %p119 = scmp.ne.s32.totalorder %s111, %s113
      %p120 = scmp.eq.s32.totalorder %s28, 5
      %p121 = por %p119, %p120
      %p122 = scmp.ne.s32.totalorder %s113, %s114
      %p123 = scmp.eq.s32.totalorder %s28, 0
      %p124 = por %p122, %p123
      %p125 = scmp.ne.s32.totalorder %s113, %s114
      %p126 = scmp.eq.s32.totalorder %s29, 5
      %p127 = por %p125, %p126
      %p129 = scmp.ne.s32.totalorder %s114, %s128
      %p130 = scmp.eq.s32.totalorder %s29, 0
      %p131 = por %p129, %p130
      %s133 = sadd.s32 %s132, 1
      %p136 = scmp.eq.s32.totalorder %s23, 5
      %p137 = scmp.ne.s32.totalorder %s132, %s134
      %p138 = scmp.eq.s32.totalorder %s23, 0
      %p139 = por %p137, %p138
      %p140 = scmp.ne.s32.totalorder %s132, %s134
      %p141 = scmp.eq.s32.totalorder %s28, 5
      %p142 = por %p140, %p141
      %p143 = scmp.ne.s32.totalorder %s134, %s135
      %p144 = scmp.eq.s32.totalorder %s28, 0
      %p145 = por %p143, %p144
      %p146 = scmp.ne.s32.totalorder %s134, %s135
      %p147 = scmp.eq.s32.totalorder %s29, 5
      %p148 = por %p146, %p147
      %p150 = scmp.ne.s32.totalorder %s135, %s149
      %p151 = scmp.eq.s32.totalorder %s29, 0
      %p152 = por %p150, %p151
      %s153 = ssub.s32 %s31, %s38
      %p154 = scmp.eq.s32.totalorder %s153, 0
      %s156 = sadd.s32 %s155, 1
      %s157 = scalar_select %p154, %s155, %s156
      %p160 = pneg %p154
      %p161 = scmp.eq.s32.totalorder %s23, 5
      %p162 = por %p160, %p161
      %p163 = scmp.ne.s32.totalorder %s155, %s158
      %p164 = scmp.eq.s32.totalorder %s23, 0
      %p165 = por %p163, %p164
      %p166 = scmp.ne.s32.totalorder %s155, %s158
      %p167 = scmp.eq.s32.totalorder %s28, 5
      %p168 = por %p166, %p167
      %p169 = scmp.ne.s32.totalorder %s158, %s159
      %p170 = scmp.eq.s32.totalorder %s28, 0
      %p171 = por %p169, %p170
      %p172 = scmp.ne.s32.totalorder %s158, %s159
      %p173 = scmp.eq.s32.totalorder %s29, 5
      %p174 = por %p172, %p173
      %p176 = scmp.ne.s32.totalorder %s159, %s175
      %p177 = scmp.eq.s32.totalorder %s29, 0
      %p178 = por %p176, %p177
      %s179 = ssub.s32 %s31, %s38
      %p180 = scmp.eq.s32.totalorder %s179, 0
      %s182 = sadd.s32 %s181, 1
      %s183 = scalar_select %p180, %s181, %s182
      %p186 = pneg %p180
      %p187 = scmp.eq.s32.totalorder %s23, 5
      %p188 = por %p186, %p187
      %p189 = scmp.ne.s32.totalorder %s181, %s184
      %p190 = scmp.eq.s32.totalorder %s23, 0
      %p191 = por %p189, %p190
      %p192 = scmp.ne.s32.totalorder %s181, %s184
      %p193 = scmp.eq.s32.totalorder %s28, 5
      %p194 = por %p192, %p193
      %p195 = scmp.ne.s32.totalorder %s184, %s185
      %p196 = scmp.eq.s32.totalorder %s28, 0
      %p197 = por %p195, %p196
      %p198 = scmp.ne.s32.totalorder %s184, %s185
      %p199 = scmp.eq.s32.totalorder %s29, 5
      %p200 = por %p198, %p199
      %p202 = scmp.ne.s32.totalorder %s185, %s201
      %p203 = scmp.eq.s32.totalorder %s29, 0
      %p204 = por %p202, %p203
      %s205 = ssub.s32 %s30, %s42
      %s206 = ssub.s32 %s31, %s38
      %s207 = sor.u32 %s205, %s206
      %p208 = scmp.eq.s32.totalorder %s207, 0
      %s210 = sadd.s32 %s209, 1
      %s211 = scalar_select %p208, %s209, %s210
      %p214 = pneg %p208
      %p215 = scmp.eq.s32.totalorder %s23, 5
      %p216 = por %p214, %p215
      %p217 = scmp.ne.s32.totalorder %s209, %s212
      %p218 = scmp.eq.s32.totalorder %s23, 0
      %p219 = por %p217, %p218
      %p220 = scmp.ne.s32.totalorder %s209, %s212
      %p221 = scmp.eq.s32.totalorder %s28, 5
      %p222 = por %p220, %p221
      %p223 = scmp.ne.s32.totalorder %s212, %s213
      %p224 = scmp.eq.s32.totalorder %s28, 0
      %p225 = por %p223, %p224
      %p226 = scmp.ne.s32.totalorder %s212, %s213
      %p227 = scmp.eq.s32.totalorder %s29, 5
      %p228 = por %p226, %p227
      %p230 = scmp.ne.s32.totalorder %s213, %s229
      %p231 = scmp.eq.s32.totalorder %s29, 0
      %p232 = por %p230, %p231
      %p233 = scmp.le.s32.totalorder 1, %s23
      %p234 = scmp.lt.s32.totalorder %s23, 7
      %p235 = pnand %p233, %p234
      %p236 = pneg %p235
      // Predicated region
      $region9: #{tpu_custom_call.1} parent=5 // pred_check
        _
      $region10: #{tpu_custom_call.1} parent=5 // pred_check_branch
        %238 = sbr.rel (%p235) target = $region12
      $region11: #{tpu_custom_call.1} parent=5 // pred_region
        %s239 = ssub.s32 %s23, 1
        // Predicated region
        $region13: #{tpu_custom_call.1} parent=11 // pred_check
          %p240 = pneg %p82
        $region14: #{tpu_custom_call.1} parent=11 // pred_check_branch
          %242 = sbr.rel (%p240) target = $region16
        $region15: #{tpu_custom_call.1} parent=11 // pred_region
          %244 = vsyncadd [#allocation7], 0
          %s245 = sshll.u32 %s1, 4
          %s246 = int_to_ptr.hbm [resolvable:$true] %s245
          %s247 = sshll.u32 [#allocation6], 4
          %s248 = int_to_ptr.vmem [resolvable:$true] %s247
          %253 = dma.hbm_to_vmem [thread:$0]  %s246, 1024, %s248, [#allocation7], 64, 64, 4
        $region16: #{tpu_custom_call.1} parent=11 // pred_fallthru
          _
        // Predicated region
        $region17: #{tpu_custom_call.1} parent=11 // pred_check
          %p254 = pneg %p103
        $region18: #{tpu_custom_call.1} parent=11 // pred_check_branch
          %256 = sbr.rel (%p254) target = $region20
        $region19: #{tpu_custom_call.1} parent=11 // pred_region
          _
        $region20: #{tpu_custom_call.1} parent=11 // pred_fallthru
          _
        // Predicated region
        $region21: #{tpu_custom_call.1} parent=11 // pred_check
          %p257 = pneg %p124
        $region22: #{tpu_custom_call.1} parent=11 // pred_check_branch
          %259 = sbr.rel (%p257) target = $region24
        $region23: #{tpu_custom_call.1} parent=11 // pred_region
          _
        $region24: #{tpu_custom_call.1} parent=11 // pred_fallthru
          _
        // Predicated region
        $region25: #{tpu_custom_call.1} parent=11 // pred_check
          %p260 = pneg %p145
        $region26: #{tpu_custom_call.1} parent=11 // pred_check_branch
          %262 = sbr.rel (%p260) target = $region28
        $region27: #{tpu_custom_call.1} parent=11 // pred_region
          %264 = vsyncadd [#allocation7], 0
          %s266 = sshll.u32 %s4, 4
          %s267 = int_to_ptr.hbm [resolvable:$true] %s266
          %s268 = sshll.u32 [#allocation8], 4
          %s269 = int_to_ptr.vmem [resolvable:$true] %s268
          %271 = dma.hbm_to_vmem [thread:$0]  %s267, 16, %s269, [#allocation7]
        $region28: #{tpu_custom_call.1} parent=11 // pred_fallthru
          _
      $region12: #{tpu_custom_call.1} parent=5 // pred_fallthru
        _
      %p272 = scmp.lt.s32.totalorder %s23, 6
      // Predicated region
      $region29: #{tpu_custom_call.1} parent=5 // pred_check
        %p273 = pneg %p272
      $region30: #{tpu_custom_call.1} parent=5 // pred_check_branch
        %275 = sbr.rel (%p273) target = $region32
      $region31: #{tpu_custom_call.1} parent=5 // pred_region
        // Predicated region
        $region33: #{tpu_custom_call.1} parent=31 // pred_check
          %p276 = pneg %p55
        $region34: #{tpu_custom_call.1} parent=31 // pred_check_branch
          %278 = sbr.rel (%p276) target = $region36
        $region35: #{tpu_custom_call.1} parent=31 // pred_region
          %s279 = sand.u32 %s45, 1
          %s280 = scalar_lea.sflag [#allocation4], %s279
          %s281 = sand.u32 %s45, 1
          %s282 = smul.addr %s281, 8
          %s283 = scalar_lea.vmem [#allocation3], %s282
          %s284 = smul.u32 2, %s30
          %286 = vsyncadd %s280, 0
          %s287 = smul.addr %s284, 4
          %s288 = scalar_lea.hbm %s0, %s287
          %s289 = sshll.u32 %s288, 4
          %s290 = int_to_ptr.hbm [resolvable:$true] %s289
          %s291 = sshll.u32 %s283, 4
          %s292 = int_to_ptr.vmem [resolvable:$true] %s291
          %297 = dma.hbm_to_vmem [thread:$0]  %s290, 128, %s292, %s280, 64, 64, 4
        $region36: #{tpu_custom_call.1} parent=31 // pred_fallthru
          _
        // Predicated region
        $region37: #{tpu_custom_call.1} parent=31 // pred_check
          %p298 = pneg %p165
        $region38: #{tpu_custom_call.1} parent=31 // pred_check_branch
          %300 = sbr.rel (%p298) target = $region40
        $region39: #{tpu_custom_call.1} parent=31 // pred_region
          %s301 = sand.u32 %s155, 1
          %s302 = scalar_lea.sflag [#allocation10], %s301
          %s303 = sand.u32 %s155, 1
          %s304 = smul.addr %s303, 64
          %s305 = scalar_lea.vmem [#allocation9], %s304
          %307 = vsyncadd %s302, 0
          %s308 = smul.addr %s31, 4
          %s309 = scalar_lea.hbm %s5, %s308
          %s310 = sshll.u32 %s309, 4
          %s311 = int_to_ptr.hbm [resolvable:$true] %s310
          %s312 = sshll.u32 %s305, 4
          %s313 = int_to_ptr.vmem [resolvable:$true] %s312
          %318 = dma.hbm_to_vmem [thread:$0]  %s311, 1024, %s313, %s302, 192, 64, 4
        $region40: #{tpu_custom_call.1} parent=31 // pred_fallthru
          _
        // Predicated region
        $region41: #{tpu_custom_call.1} parent=31 // pred_check
          %p319 = pneg %p191
        $region42: #{tpu_custom_call.1} parent=31 // pred_check_branch
          %321 = sbr.rel (%p319) target = $region44
        $region43: #{tpu_custom_call.1} parent=31 // pred_region
          %p322 = scmp.lt.s32.totalorder %s31, 2
          %s323 = scalar_select %p322, %s31, 2
          %s324 = scalar_lea.vmem %s6, %s323
        $region44: #{tpu_custom_call.1} parent=31 // pred_fallthru
          _
      $region32: #{tpu_custom_call.1} parent=5 // pred_fallthru
        _
      %p325 = scmp.le.s32.totalorder 1, %s23
      %p326 = scmp.lt.s32.totalorder %s23, 7
      %p327 = pnand %p325, %p326
      %p328 = pneg %p327
      // Predicated region
      $region45: #{tpu_custom_call.1} parent=5 // pred_check
        _
      $region46: #{tpu_custom_call.1} parent=5 // pred_check_branch
        %330 = sbr.rel (%p327) target = $region48
      $region47: #{tpu_custom_call.1} parent=5 // pred_region
        %s331 = ssub.s32 %s23, 1
        %s332 = sand.u32 %s48, 1
        %s333 = scalar_lea.sflag [#allocation4], %s332
        %s334 = sand.u32 %s48, 1
        %s335 = smul.addr %s334, 8
        %s336 = scalar_lea.vmem [#allocation3], %s335
        // Predicated region
        $region49: #{tpu_custom_call.1} parent=47 // pred_check
          %p337 = pneg %p61
        $region50: #{tpu_custom_call.1} parent=47 // pred_check_branch
          %339 = sbr.rel (%p337) target = $region52
        $region51: #{tpu_custom_call.1} parent=47 // pred_region
          %341 = dma.done %s333, 128
        $region52: #{tpu_custom_call.1} parent=47 // pred_fallthru
          _
        // Predicated region
        $region53: #{tpu_custom_call.1} parent=47 // pred_check
          %p342 = pneg %p82
        $region54: #{tpu_custom_call.1} parent=47 // pred_check_branch
          %344 = sbr.rel (%p342) target = $region56
        $region55: #{tpu_custom_call.1} parent=47 // pred_region
          %346 = dma.done [#allocation7], 1024
        $region56: #{tpu_custom_call.1} parent=47 // pred_fallthru
          _
        // Predicated region
        $region57: #{tpu_custom_call.1} parent=47 // pred_check
          %p347 = pneg %p145
        $region58: #{tpu_custom_call.1} parent=47 // pred_check_branch
          %349 = sbr.rel (%p347) target = $region60
        $region59: #{tpu_custom_call.1} parent=47 // pred_region
          %351 = dma.done [#allocation7], 16
        $region60: #{tpu_custom_call.1} parent=47 // pred_fallthru
          _
        %s352 = sand.u32 %s158, 1
        %s353 = scalar_lea.sflag [#allocation10], %s352
        %s354 = sand.u32 %s158, 1
        %s355 = smul.addr %s354, 64
        %s356 = scalar_lea.vmem [#allocation9], %s355
        // Predicated region
        $region61: #{tpu_custom_call.1} parent=47 // pred_check
          %p357 = pneg %p171
        $region62: #{tpu_custom_call.1} parent=47 // pred_check_branch
          %359 = sbr.rel (%p357) target = $region64
        $region63: #{tpu_custom_call.1} parent=47 // pred_region
          %361 = dma.done %s353, 1024
        $region64: #{tpu_custom_call.1} parent=47 // pred_fallthru
          _
        %s362 = sand.u32 %s48, 1
        %s363 = scalar_lea.sflag [#allocation4], %s362
        %s364 = sand.u32 %s48, 1
        %s365 = smul.addr %s364, 8
        %s366 = scalar_lea.vmem [#allocation3], %s365
        %p367 = pneg %p61
        %p368 = pneg %p58
        %p369 = pneg %p82
        %p370 = pneg %p79
        %p371 = pneg %p103
        %p372 = pneg %p100
        %p373 = pneg %p124
        %p374 = pneg %p121
        %p375 = pneg %p145
        %p376 = pneg %p142
        %s377 = sand.u32 %s158, 1
        %s378 = scalar_lea.sflag [#allocation10], %s377
        %s379 = sand.u32 %s158, 1
        %s380 = smul.addr %s379, 64
        %s381 = scalar_lea.vmem [#allocation9], %s380
        %p382 = pneg %p171
        %p383 = pneg %p168
        %p384 = scmp.lt.s32.totalorder %s33, 2
        %s385 = scalar_select %p384, %s33, 2
        %s386 = scalar_lea.vmem %s6, %s385
        %p387 = pneg %p197
        %p388 = pneg %p194
        %p389 = pneg %p225
        %p390 = pneg %p222
        %s391 = sand.u32 %s212, 1
        %s392 = scalar_lea.sflag [#allocation5], %s391
        %s393 = sand.u32 %s212, 1
        %s394 = smul.addr %s393, 8
        %s395 = scalar_lea.vmem [#allocation11], %s394
        %s396 = smul.u32 2, %s32
        %p397 = scmp.lt.s32.totalorder %s33, 2
        %s398 = scalar_select %p397, %s33, 2
        %s399 = scalar_lea.vmem %s6, %s398
        %s400 = smul.u32 2, %s32
        %p401 = scmp.eq.s32.totalorder %s33, 0
        // Predicated region
        $region65: #{tpu_custom_call.1} parent=47 // pred_check
          %p402 = pneg %p401
        $region66: #{tpu_custom_call.1} parent=47 // pred_check_branch
          %404 = sbr.rel (%p402) target = $region68
        $region67: #{tpu_custom_call.1} parent=47 // pred_region
          %v405 = vld [vmem:[%s336] sm:$0xf]
          %v406 = vld [vmem:[%s336 + $0x4] sm:$0xf]
          %v407 = vld [vmem:[#allocation6] sm:$0xf]
          %v408 = vld [vmem:[#allocation6 + $0x4] sm:$0xf]
          %v409 = vld [vmem:[#allocation6 + $0x8] sm:$0xf]
          %v410 = vld [vmem:[#allocation6 + $0xc] sm:$0xf]
          %v411 = vld [vmem:[#allocation6 + $0x10] sm:$0xf]
          %v412 = vld [vmem:[#allocation6 + $0x14] sm:$0xf]
          %v413 = vld [vmem:[#allocation6 + $0x18] sm:$0xf]
          %v414 = vld [vmem:[#allocation6 + $0x1c] sm:$0xf]
          %v415 = vld [vmem:[#allocation6 + $0x20] sm:$0xf]
          %v416 = vld [vmem:[#allocation6 + $0x24] sm:$0xf]
          %v417 = vld [vmem:[#allocation6 + $0x28] sm:$0xf]
          %v418 = vld [vmem:[#allocation6 + $0x2c] sm:$0xf]
          %v419 = vld [vmem:[#allocation6 + $0x30] sm:$0xf]
          %v420 = vld [vmem:[#allocation6 + $0x34] sm:$0xf]
          %v421 = vld [vmem:[#allocation6 + $0x38] sm:$0xf]
          %v422 = vld [vmem:[#allocation6 + $0x3c] sm:$0xf]
          %v423 = vld [vmem:[%s2] sm:$0x1]
          %v425 = vperm.slane %v423, 0
          %v429 = vunpack.c.l.b16 %v405
          %v430 = vunpack.c.l.b16 %v406
          %v431 = vpack.c.b16 %v430, %v429
          %v449 = vunpack.c.l.b16 %v407
          %v450 = vunpack.c.l.b16 %v408
          %v451 = vunpack.c.l.b16 %v409
          %v452 = vunpack.c.l.b16 %v410
          %v453 = vunpack.c.l.b16 %v411
          %v454 = vunpack.c.l.b16 %v412
          %v455 = vunpack.c.l.b16 %v413
          %v456 = vunpack.c.l.b16 %v414
          %v457 = vunpack.c.l.b16 %v415
          %v458 = vunpack.c.l.b16 %v416
          %v459 = vunpack.c.l.b16 %v417
          %v460 = vunpack.c.l.b16 %v418
          %v461 = vunpack.c.l.b16 %v419
          %v462 = vunpack.c.l.b16 %v420
          %v463 = vunpack.c.l.b16 %v421
          %v464 = vunpack.c.l.b16 %v422
          %v465 = vpack.c.b16 %v450, %v449
          %v466 = vpack.c.b16 %v452, %v451
          %v467 = vpack.c.b16 %v454, %v453
          %v468 = vpack.c.b16 %v456, %v455
          %v469 = vpack.c.b16 %v458, %v457
          %v470 = vpack.c.b16 %v460, %v459
          %v471 = vpack.c.b16 %v462, %v461
          %v472 = vpack.c.b16 %v464, %v463
          %481 = vmatpush.bf16.msra.mxu0 %v472
          %482 = vmatpush.bf16.msra.mxu0 %v471
          %483 = vmatpush.bf16.msra.mxu0 %v470
          %484 = vmatpush.bf16.msra.mxu0 %v469
          %485 = vmatpush.bf16.msra.mxu0 %v468
          %486 = vmatpush.bf16.msra.mxu0 %v467
          %487 = vmatpush.bf16.msra.mxu0 %v466
          %488 = vmatpush.bf16.msra.mxu0 %v465
          %489 = vmatmul.bf16.gmra.mxu0 %v431
          %v490 = vpop.f32.mrf.mxu0
          %v491 = vadd.f32 %v425, %v490
          %v492 = vpop.f32.mrf.mxu0
          %v493 = vadd.f32 %v425, %v492
          %494 = vdwg.mxu0
          %v495 = vmul.f32 %v491, 0.5
          %v496 = vmul.f32 %v493, 0.5
          %v497 = vrcp.pop 1.4142135
          %v498 = vmul.f32 1.4142135, %v497
          %v499 = vsub.f32 1.0, %v498
          %v500 = vmul.f32 %v497, %v499
          %v501 = vadd.f32 %v497, %v500
          %vm502 = vweird.f32 %v497
          %v503 = vsel %vm502, %v497, %v501
          %v504 = vmul.f32 %v491, %v503
          %v505 = vmul.f32 %v493, %v503
          %v506 = vmul.f32 %v504, %v504
          %v507 = vmin.f32 16.0, %v506
          %v508 = vmul.f32 %v507, 2.1237322e-06
          %v509 = vadd.f32 %v508, 0.00028619796
          %v510 = vmul.f32 %v507, %v509
          %v511 = vadd.f32 %v510, 0.0036580483
          %v512 = vmul.f32 %v507, %v511
          %v513 = vadd.f32 %v512, 0.05243302
          %v514 = vmul.f32 %v507, %v513
          %v515 = vadd.f32 %v514, 0.18741608
          %v516 = vmul.f32 %v507, %v515
          %v517 = vadd.f32 %v516, 1.1283791
          %v518 = vmul.f32 %v504, %v517
          %v519 = vmul.f32 %v507, 3.8918573e-05
          %v520 = vadd.f32 %v519, 0.001143296
          %v521 = vmul.f32 %v507, %v520
          %v522 = vadd.f32 %v521, 0.014752088
          %v523 = vmul.f32 %v507, %v522
          %v524 = vadd.f32 %v523, 0.112945676
          %v525 = vmul.f32 %v507, %v524
          %v526 = vadd.f32 %v525, 0.4994258
          %v527 = vmul.f32 %v507, %v526
          %v528 = vadd.f32 %v527, 1.0
          %v529 = vrcp.pop %v528
          %v530 = vmul.f32 %v528, %v529
          %v531 = vsub.f32 1.0, %v530
          %v532 = vmul.f32 %v529, %v531
          %v533 = vadd.f32 %v529, %v532
          %vm534 = vweird.f32 %v528
          %vm535 = vweird.f32 %v529
          %vm536 = vmor %vm534, %vm535
          %v537 = vsel %vm536, %v529, %v533
          %v538 = vand.u32 2147483647, %v528
          %vm539 = vcmp.eq.f32.partialorder %v538, 8.507059e+37
          %v540 = vand.u32 %v528, 2147483648
          %v541 = vor.u32 1.1754944e-38, %v540
          %v542 = vsel %vm539, %v541, %v537
          %v543 = vmul.f32 %v518, %v542
          %v544 = vmin.f32 %v543, 1.0
          %v545 = vmax.f32 %v544, -1.0
          %v546 = vmul.f32 %v505, %v505
          %v547 = vmin.f32 16.0, %v546
          %v548 = vmul.f32 %v547, 2.1237322e-06
          %v549 = vadd.f32 %v548, 0.00028619796
          %v550 = vmul.f32 %v547, %v549
          %v551 = vadd.f32 %v550, 0.0036580483
          %v552 = vmul.f32 %v547, %v551
          %v553 = vadd.f32 %v552, 0.05243302
          %v554 = vmul.f32 %v547, %v553
          %v555 = vadd.f32 %v554, 0.18741608
          %v556 = vmul.f32 %v547, %v555
          %v557 = vadd.f32 %v556, 1.1283791
          %v558 = vmul.f32 %v505, %v557
          %v559 = vmul.f32 %v547, 3.8918573e-05
          %v560 = vadd.f32 %v559, 0.001143296
          %v561 = vmul.f32 %v547, %v560
          %v562 = vadd.f32 %v561, 0.014752088
          %v563 = vmul.f32 %v547, %v562
          %v564 = vadd.f32 %v563, 0.112945676
          %v565 = vmul.f32 %v547, %v564
          %v566 = vadd.f32 %v565, 0.4994258
          %v567 = vmul.f32 %v547, %v566
          %v568 = vadd.f32 %v567, 1.0
          %v569 = vrcp.pop %v568
          %v570 = vmul.f32 %v568, %v569
          %v571 = vsub.f32 1.0, %v570
          %v572 = vmul.f32 %v569, %v571
          %v573 = vadd.f32 %v569, %v572
          %vm574 = vweird.f32 %v568
          %vm575 = vweird.f32 %v569
          %vm576 = vmor %vm574, %vm575
          %v577 = vsel %vm576, %v569, %v573
          %v578 = vand.u32 2147483647, %v568
          %vm579 = vcmp.eq.f32.partialorder %v578, 8.507059e+37
          %v580 = vand.u32 %v568, 2147483648
          %v581 = vor.u32 1.1754944e-38, %v580
          %v582 = vsel %vm579, %v581, %v577
          %v583 = vmul.f32 %v558, %v582
          %v584 = vmin.f32 %v583, 1.0
          %v585 = vmax.f32 %v584, -1.0
          %v586 = vadd.f32 %v545, 1.0
          %v587 = vadd.f32 %v585, 1.0
          %v588 = vmul.f32 %v495, %v586
          %v589 = vmul.f32 %v496, %v587
          %590 = vadd.xlane.f32.xlu0 %v588
          %v591 = vpop.xlane.xlu0 %590
          %592 = vadd.xlane.f32.xlu0 %v589
          %v593 = vpop.xlane.xlu0 %592
          %v594 = vrcp.pop 128.0
          %v595 = vmul.f32 128.0, %v594
          %v596 = vsub.f32 1.0, %v595
          %v597 = vmul.f32 %v594, %v596
          %v598 = vadd.f32 %v594, %v597
          %vm599 = vweird.f32 %v594
          %v600 = vsel %vm599, %v594, %v598
          %v601 = vmul.f32 %v591, %v600
          %v602 = vmul.f32 %v593, %v600
          %v603 = vsub.f32 %v588, %v601
          %v604 = vsub.f32 %v589, %v602
          %v605 = vmul.f32 %v603, %v603
          %v606 = vmul.f32 %v604, %v604
          %607 = vadd.xlane.f32.xlu0 %v605
          %v608 = vpop.xlane.xlu0 %607
          %609 = vadd.xlane.f32.xlu0 %v606
          %v610 = vpop.xlane.xlu0 %609
          %v611 = vmul.f32 %v608, %v600
          %v612 = vmul.f32 %v610, %v600
          %v613 = vadd.f32 %v611, 1e-12
          %v614 = vadd.f32 %v612, 1e-12
          %v615 = vrsqrt.pop %v613
          %v616 = vmul.f32 %v615, %v613
          %v617 = vmul.f32 %v616, %v615
          %v618 = vmul.f32 0.5, %v617
          %v619 = vsub.f32 1.5, %v618
          %v620 = vmul.f32 %v615, %v619
          %vm621 = vweird.f32 %v613
          %vm622 = vweird.f32 %v615
          %vm623 = vmor %vm621, %vm622
          %v624 = vsel %vm623, %v615, %v620
          %v625 = vrsqrt.pop %v614
          %v626 = vmul.f32 %v625, %v614
          %v627 = vmul.f32 %v626, %v625
          %v628 = vmul.f32 0.5, %v627
          %v629 = vsub.f32 1.5, %v628
          %v630 = vmul.f32 %v625, %v629
          %vm631 = vweird.f32 %v614
          %vm632 = vweird.f32 %v625
          %vm633 = vmor %vm631, %vm632
          %v634 = vsel %vm633, %v625, %v630
          %v635 = vmul.f32 %v603, %v624
          %v636 = vmul.f32 %v604, %v634
          %v637 = vld [vmem:[%s3] sm:$0x1]
          %v639 = vperm.slane %v637, 0
          %v641 = vmul.f32 %v635, %v639
          %v642 = vmul.f32 %v636, %v639
          %v643 = vld [vmem:[#allocation8] sm:$0x1]
          %v645 = vperm.slane %v643, 0
          %v647 = vadd.f32 %v641, %v645
          %v648 = vadd.f32 %v642, %v645
          %v649 = vpack.c.bf16 %v647, %v647
          %v650 = vpack.c.bf16 %v648, %v648
          %651 = vst [vmem:[#allocation2] sm:$0xf] %v649
          %652 = vst [vmem:[#allocation2 + $0x4] sm:$0xf] %v650
        $region68: #{tpu_custom_call.1} parent=47 // pred_fallthru
          _
        %v653 = vld [vmem:[#allocation2] sm:$0xf]
        %v654 = vld [vmem:[#allocation2 + $0x4] sm:$0xf]
        %v655 = vld [vmem:[%s356] sm:$0xf]
        %v656 = vld [vmem:[%s356 + $0x4] sm:$0xf]
        %v657 = vld [vmem:[%s356 + $0x8] sm:$0xf]
        %v658 = vld [vmem:[%s356 + $0xc] sm:$0xf]
        %v659 = vld [vmem:[%s356 + $0x10] sm:$0xf]
        %v660 = vld [vmem:[%s356 + $0x14] sm:$0xf]
        %v661 = vld [vmem:[%s356 + $0x18] sm:$0xf]
        %v662 = vld [vmem:[%s356 + $0x1c] sm:$0xf]
        %v663 = vld [vmem:[%s356 + $0x20] sm:$0xf]
        %v664 = vld [vmem:[%s356 + $0x24] sm:$0xf]
        %v665 = vld [vmem:[%s356 + $0x28] sm:$0xf]
        %v666 = vld [vmem:[%s356 + $0x2c] sm:$0xf]
        %v667 = vld [vmem:[%s356 + $0x30] sm:$0xf]
        %v668 = vld [vmem:[%s356 + $0x34] sm:$0xf]
        %v669 = vld [vmem:[%s356 + $0x38] sm:$0xf]
        %v670 = vld [vmem:[%s356 + $0x3c] sm:$0xf]
        %v671 = vld [vmem:[%s399] sm:$0x1]
        %v673 = vperm.slane %v671, 0
        %v677 = vunpack.c.l.b16 %v653
        %v678 = vunpack.c.l.b16 %v654
        %v679 = vpack.c.b16 %v678, %v677
        %v697 = vunpack.c.l.b16 %v655
        %v698 = vunpack.c.l.b16 %v656
        %v699 = vunpack.c.l.b16 %v657
        %v700 = vunpack.c.l.b16 %v658
        %v701 = vunpack.c.l.b16 %v659
        %v702 = vunpack.c.l.b16 %v660
        %v703 = vunpack.c.l.b16 %v661
        %v704 = vunpack.c.l.b16 %v662
        %v705 = vunpack.c.l.b16 %v663
        %v706 = vunpack.c.l.b16 %v664
        %v707 = vunpack.c.l.b16 %v665
        %v708 = vunpack.c.l.b16 %v666
        %v709 = vunpack.c.l.b16 %v667
        %v710 = vunpack.c.l.b16 %v668
        %v711 = vunpack.c.l.b16 %v669
        %v712 = vunpack.c.l.b16 %v670
        %v713 = vpack.c.b16 %v698, %v697
        %v714 = vpack.c.b16 %v700, %v699
        %v715 = vpack.c.b16 %v702, %v701
        %v716 = vpack.c.b16 %v704, %v703
        %v717 = vpack.c.b16 %v706, %v705
        %v718 = vpack.c.b16 %v708, %v707
        %v719 = vpack.c.b16 %v710, %v709
        %v720 = vpack.c.b16 %v712, %v711
        %729 = vmatpush.bf16.msra.mxu0 %v720
        %730 = vmatpush.bf16.msra.mxu0 %v719
        %731 = vmatpush.bf16.msra.mxu0 %v718
        %732 = vmatpush.bf16.msra.mxu0 %v717
        %733 = vmatpush.bf16.msra.mxu0 %v716
        %734 = vmatpush.bf16.msra.mxu0 %v715
        %735 = vmatpush.bf16.msra.mxu0 %v714
        %736 = vmatpush.bf16.msra.mxu0 %v713
        %737 = vmatmul.bf16.gmra.mxu0 %v679
        %v738 = vpop.f32.mrf.mxu0
        %v739 = vadd.f32 %v673, %v738
        %v740 = vpop.f32.mrf.mxu0
        %v741 = vadd.f32 %v673, %v740
        %742 = vdwg.mxu0
        %v743 = vpack.c.bf16 %v739, %v739
        %v744 = vpack.c.bf16 %v741, %v741
        %745 = vst [vmem:[%s395] sm:$0xf] %v743
        %746 = vst [vmem:[%s395 + $0x4] sm:$0xf] %v744
        %s747 = sand.u32 %s212, 1
        %s748 = scalar_lea.sflag [#allocation5], %s747
        %s749 = sand.u32 %s212, 1
        %s750 = smul.addr %s749, 8
        %s751 = scalar_lea.vmem [#allocation11], %s750
        // Predicated region
        $region69: #{tpu_custom_call.1} parent=47 // pred_check
          %p752 = pneg %p222
        $region70: #{tpu_custom_call.1} parent=47 // pred_check_branch
          %754 = sbr.rel (%p752) target = $region72
        $region71: #{tpu_custom_call.1} parent=47 // pred_region
          %s755 = smul.u32 2, %s32
          %757 = vsyncadd %s748, 0
          %s758 = smul.addr %s755, 3
          %s759 = sadd.s32 %s33, %s758
          %s760 = smul.addr %s759, 4
          %s761 = scalar_lea.hbm %s7, %s760
          %s762 = sshll.u32 %s751, 4
          %s763 = int_to_ptr.vmem [resolvable:$true] %s762
          %s764 = sshll.u32 %s761, 4
          %s765 = int_to_ptr.hbm [resolvable:$true] %s764
          %770 = dma.vmem_to_hbm [thread:$0]  %s763, 128, %s765, %s748, 64, 192, 4
        $region72: #{tpu_custom_call.1} parent=47 // pred_fallthru
          _
      $region48: #{tpu_custom_call.1} parent=5 // pred_fallthru
        _
      %p771 = scmp.le.s32.totalorder 2, %s23
      // Predicated region
      $region73: #{tpu_custom_call.1} parent=5 // pred_check
        %p772 = pneg %p771
      $region74: #{tpu_custom_call.1} parent=5 // pred_check_branch
        %774 = sbr.rel (%p772) target = $region76
      $region75: #{tpu_custom_call.1} parent=5 // pred_region
        %s775 = ssub.s32 %s23, 2
        // Predicated region
        $region77: #{tpu_custom_call.1} parent=75 // pred_check
          %p776 = pneg %p228
        $region78: #{tpu_custom_call.1} parent=75 // pred_check_branch
          %778 = sbr.rel (%p776) target = $region80
        $region79: #{tpu_custom_call.1} parent=75 // pred_region
          %s779 = sand.u32 %s213, 1
          %s780 = scalar_lea.sflag [#allocation5], %s779
          %s781 = sand.u32 %s213, 1
          %s782 = smul.addr %s781, 8
          %s783 = scalar_lea.vmem [#allocation11], %s782
          %785 = dma.done %s780, 128
        $region80: #{tpu_custom_call.1} parent=75 // pred_fallthru
          _
      $region76: #{tpu_custom_call.1} parent=5 // pred_fallthru
        _
    $region6: #{tpu_custom_call.1} parent=1 // loop_footer
      %s27 = sadd.s32 1, %s23
    $region7: #{tpu_custom_call.1} parent=1 // loop_footer_branch
      %22 = sbr.rel target = $region3
    $region8: #{tpu_custom_call.1} parent=1 // loop_exit
      _
    %786 = vsyncpa [#allocation4], 1
    %s787 = scalar_lea.sflag [#allocation4], 1
    %788 = vsyncpa %s787, 1
    %789 = vsyncpa [#allocation7], 1
    %790 = vsyncpa [#allocation10], 1
    %s791 = scalar_lea.sflag [#allocation10], 1
    %792 = vsyncpa %s791, 1
    %793 = vsyncpa [#allocation5], 1
    %s794 = scalar_lea.sflag [#allocation5], 1
    %795 = vsyncpa %s794, 1

</llo_original>
